<compile_context>
chip_gen: v7x
topology: tpu7x:2x2x1
jax: 0.10.0
libtpu: 0.0.40
codegen_flags: <defaults>
</compile_context>

<pallas_src>
import functools

import jax
import jax.numpy as jnp
from jax.experimental import pallas as pl
from jax.experimental.pallas import tpu as pltpu


def _ls_ce_kernel(logits_ref, labels_ref, out_ref, *, n_rows, block_rows,
                  labels_normalized):
    """Partial soft-CE sum over one (block_rows, C) tile."""
    x = logits_ref[...].astype(jnp.float32)   # (tm, C)
    t = labels_ref[...].astype(jnp.float32)   # (tm, C)

    # numerically stable logsumexp along the class axis
    m = jnp.max(x, axis=-1, keepdims=True)                               # (tm, 1)
    lse = m + jnp.log(jnp.sum(jnp.exp(x - m), axis=-1, keepdims=True))   # (tm, 1)

    # -(t * log_softmax(x)).sum(-1) == lse * sum(t) - sum(t * x)
    txsum = jnp.sum(t * x, axis=-1, keepdims=True)                       # (tm, 1)
    if labels_normalized:
        # sum(t) == 1 guaranteed -> skip one full-tile pass + XLU reduce
        row_loss = lse - txsum
    else:
        tsum = jnp.sum(t, axis=-1, keepdims=True)                        # (tm, 1)
        row_loss = lse * tsum - txsum

    # Ragged tail: grid*block_rows may overshoot N and the out-of-range tile
    # contents are unspecified, so zero those rows' contributions (jnp.where
    # selects, it does not multiply, so garbage inf/nan cannot leak through).
    row0 = pl.program_id(0) * block_rows
    row_ids = row0 + jax.lax.broadcasted_iota(jnp.int32, (block_rows, 1), 0)
    row_loss = jnp.where(row_ids < n_rows, row_loss, 0.0)                # (tm, 1)

    partial = jnp.sum(row_loss, keepdims=True)                           # (1, 1)
    out_ref[...] = jnp.broadcast_to(partial, out_ref.shape)              # (8, 128)


def _round_up(x, m):
    return ((x + m - 1) // m) * m


def _cdiv(a, b):
    return (a + b - 1) // b


def label_smoothing_cross_entropy(logits, soft_labels, *, reduction="mean",
                                  labels_normalized=False):
    """Soft-target cross entropy (forward of LabelSmoothingCrossEntropyLoss).

    Accepts f32 or bf16 inputs; math is done in f32 inside the kernel.
    `labels_normalized=True` skips the sum(t) reduction when the targets are
    known to be probability distributions (true for label smoothing).
    """
    n, c = logits.shape
    assert soft_labels.shape == (n, c)

    in_itemsize = max(jnp.dtype(logits.dtype).itemsize,
                      jnp.dtype(soft_labels.dtype).itemsize)
    sublane = 8 if in_itemsize >= 4 else 16

    # ---- VMEM budget: query the hardware (v7x: 64 MiB/TC, v5e/v6e: 128 MiB),
    # keep 25% headroom for compiler scratch / output buffers. -------------
    try:
        vmem_cap = int(pltpu.get_tpu_info().vmem_capacity_bytes)
    except Exception:  # off-TPU tracing / older jax: assume the small (v7x) size
        vmem_cap = 64 * 1024 * 1024
    vmem_limit = (vmem_cap * 3) // 4
    headroom = 2 * 1024 * 1024

    # per-row VMEM cost: 2 inputs x 2 pipeline buffers in the input dtype,
    # plus ~4 full-width f32 temporaries in the body (x, t casts, exp(x-m), t*x).
    per_row_bytes = 4 * c * in_itemsize + 4 * c * 4
    budget = max(vmem_limit - headroom, per_row_bytes * sublane)
    block_rows = max(sublane, (budget // per_row_bytes) // sublane * sublane)

    # don't tile past the batch ...
    block_rows = min(block_rows, _round_up(n, sublane))
    # ... and keep >=2 grid steps when possible so the 'parallel' axis can
    # shard across both TensorCores on v7x (harmless ~0.35us extra elsewhere).
    if n >= 2 * sublane:
        block_rows = min(block_rows, _round_up(_cdiv(n, 2), sublane))
    # TODO(synk): for huge C (>=~256K f32) even sublane-row tiles exceed the
    # budget; add a second grid axis over C with an online logsumexp carry.
    # TODO(synk): offer a hard-label + epsilon entry point (only logits read
    # from HBM -> ~2x less traffic) when soft labels come from label smoothing.

    num_blocks = _cdiv(n, block_rows)

    kernel = functools.partial(_ls_ce_kernel, n_rows=n, block_rows=block_rows,
                               labels_normalized=labels_normalized)

    partials = pl.pallas_call(
        kernel,
        out_shape=jax.ShapeDtypeStruct((num_blocks * 8, 128), jnp.float32),
        grid_spec=pltpu.PrefetchScalarGridSpec(
            num_scalar_prefetch=0,
            grid=(num_blocks,),
            in_specs=[
                # last block dim == full C: exempt from 128-divisibility
                pl.BlockSpec((block_rows, c), lambda i: (i, 0)),
                pl.BlockSpec((block_rows, c), lambda i: (i, 0)),
            ],
            out_specs=pl.BlockSpec((8, 128), lambda i: (i, 0)),
        ),
        compiler_params=pltpu.CompilerParams(
            # independent per-block partials -> no carried state
            dimension_semantics=("parallel",),
            vmem_limit_bytes=vmem_limit,
        ),
    )(logits, soft_labels)

    # each (8,128) output block is a broadcast of one partial sum; pick one
    # representative per block and finish the tiny reduction in plain JAX.
    per_block = partials.reshape(num_blocks, 8, 128)[:, 0, 0]
    total = jnp.sum(per_block)

    if reduction == "mean":
        return total / jnp.float32(n)
    if reduction == "sum":
        return total
    raise ValueError(f"unsupported reduction: {reduction}")


def _reference(logits, soft_labels):
    logp = jax.nn.log_softmax(logits.astype(jnp.float32), axis=-1)
    return jnp.mean(-jnp.sum(soft_labels.astype(jnp.float32) * logp, axis=-1))


if __name__ == "__main__":
    key = jax.random.PRNGKey(0)
    k1, k2 = jax.random.split(key)
    N, C = 16, 32  # small shapes: batch=16, num_classes=32 (C not 128-aligned)

    logits = jax.random.normal(k1, (N, C), dtype=jnp.float32)
    # soft labels: valid probability distributions over classes
    raw = jax.random.normal(k2, (N, C), dtype=jnp.float32)
    soft_labels = jax.nn.softmax(raw, axis=-1)

    loss = label_smoothing_cross_entropy(logits, soft_labels)
    jax.block_until_ready(loss)

    ref = _reference(logits, soft_labels)
    assert jnp.allclose(loss, ref, atol=1e-5, rtol=1e-5), (loss, ref)

    # also exercise the normalized-labels fast path (same semantics here)
    loss_fast = label_smoothing_cross_entropy(logits, soft_labels,
                                              labels_normalized=True)
    jax.block_until_ready(loss_fast)
    assert jnp.allclose(loss_fast, ref, atol=1e-5, rtol=1e-5), (loss_fast, ref)

    print("KERNEL_OK")
</pallas_src>

<mosaic_0001>
module attributes {stable_mosaic.version = 11 : i64} {
  func.func @_ls_ce_kernel(%arg0: i32, %arg1: memref<8x32xf32, #tpu.memory_space<vmem>>, %arg2: memref<8x32xf32, #tpu.memory_space<vmem>>, %arg3: memref<8x128xf32, #tpu.memory_space<vmem>>) attributes {dimension_semantics = [#tpu.dimension_semantics<parallel>], iteration_bounds = array<i64: 2>, scalar_prefetch = 0 : i64, scratch_operands = 0 : i64, tpu.core_type = #tpu.core_type<tc>, window_params = [{transform_indices = @transform_0, window_bounds = array<i64: 8, 32>}, {transform_indices = @transform_1, window_bounds = array<i64: 8, 32>}, {transform_indices = @transform_2, window_bounds = array<i64: 8, 128>}]} {
    %c0 = arith.constant 0 : index
    %c0_0 = arith.constant 0 : index
    %0 = vector.load %arg1[%c0, %c0_0] : memref<8x32xf32, #tpu.memory_space<vmem>>, vector<8x32xf32>
    %c0_1 = arith.constant 0 : index
    %c0_2 = arith.constant 0 : index
    %1 = vector.load %arg2[%c0_1, %c0_2] : memref<8x32xf32, #tpu.memory_space<vmem>>, vector<8x32xf32>
    %cst = arith.constant dense<0xFF800000> : vector<8xf32>
    %2 = vector.multi_reduction <maximumf>, %0, %cst [1] : vector<8x32xf32> to vector<8xf32>
    %3 = vector.shape_cast %2 : vector<8xf32> to vector<8x1xf32>
    %4 = vector.broadcast %3 : vector<8x1xf32> to vector<8x32xf32>
    %5 = arith.subf %0, %4 : vector<8x32xf32>
    %6 = math.exp %5 : vector<8x32xf32>
    %cst_3 = arith.constant dense<0.000000e+00> : vector<8xf32>
    %7 = vector.multi_reduction <add>, %6, %cst_3 [1] : vector<8x32xf32> to vector<8xf32>
    %8 = vector.shape_cast %7 : vector<8xf32> to vector<8x1xf32>
    %9 = math.log %8 : vector<8x1xf32>
    %10 = arith.addf %3, %9 : vector<8x1xf32>
    %11 = arith.mulf %1, %0 : vector<8x32xf32>
    %cst_4 = arith.constant dense<0.000000e+00> : vector<8xf32>
    %12 = vector.multi_reduction <add>, %11, %cst_4 [1] : vector<8x32xf32> to vector<8xf32>
    %13 = vector.shape_cast %12 : vector<8xf32> to vector<8x1xf32>
    %cst_5 = arith.constant dense<0.000000e+00> : vector<8xf32>
    %14 = vector.multi_reduction <add>, %1, %cst_5 [1] : vector<8x32xf32> to vector<8xf32>
    %15 = vector.shape_cast %14 : vector<8xf32> to vector<8x1xf32>
    %16 = arith.mulf %10, %15 : vector<8x1xf32>
    %17 = arith.subf %16, %13 : vector<8x1xf32>
    %c8_i32 = arith.constant 8 : i32
    %18 = arith.muli %arg0, %c8_i32 : i32
    %19 = tpu.iota {dimensions = array<i32: 0>} : vector<8x1xi32>
    %20 = vector.broadcast %18 : i32 to vector<8x1xi32>
    %21 = arith.addi %20, %19 : vector<8x1xi32>
    %c16_i32 = arith.constant 16 : i32
    %22 = vector.broadcast %c16_i32 : i32 to vector<8x1xi32>
    %23 = arith.cmpi slt, %21, %22 : vector<8x1xi32>
    %cst_6 = arith.constant 0.000000e+00 : f32
    %24 = vector.broadcast %cst_6 : f32 to vector<8x1xf32>
    %25 = arith.select %23, %17, %24 : vector<8x1xi1>, vector<8x1xf32>
    %26 = vector.shape_cast %25 : vector<8x1xf32> to vector<1x8x1xf32>
    %cst_7 = arith.constant dense<0.000000e+00> : vector<1xf32>
    %27 = vector.multi_reduction <add>, %26, %cst_7 [1, 2] : vector<1x8x1xf32> to vector<1xf32>
    %28 = vector.shape_cast %27 : vector<1xf32> to vector<1x1x1xf32>
    %29 = vector.extract %28[0, 0, 0] : f32 from vector<1x1x1xf32>
    %30 = vector.broadcast %29 : f32 to vector<1x1xf32>
    %31 = vector.shape_cast %30 : vector<1x1xf32> to vector<1x1xf32>
    %32 = vector.broadcast %31 : vector<1x1xf32> to vector<8x128xf32>
    %c0_8 = arith.constant 0 : index
    %c0_9 = arith.constant 0 : index
    %33 = vector.load %arg3[%c0_8, %c0_9] : memref<8x128xf32, #tpu.memory_space<vmem>>, vector<8x128xf32>
    tpu.vector_store %arg3[%c0_8, %c0_9], %32 {strides = array<i32>} : memref<8x128xf32, #tpu.memory_space<vmem>>, vector<8x128xf32>,
    return
  }
  func.func @transform_0(%arg0: i32) -> (i32, i32) {
    %c0_i32 = arith.constant 0 : i32
    %c0_i32_0 = arith.constant 0 : i32
    return %arg0, %c0_i32 : i32, i32
  }
  func.func @transform_1(%arg0: i32) -> (i32, i32) {
    %c0_i32 = arith.constant 0 : i32
    %c0_i32_0 = arith.constant 0 : i32
    return %arg0, %c0_i32 : i32, i32
  }
  func.func @transform_2(%arg0: i32) -> (i32, i32) {
    %c0_i32 = arith.constant 0 : i32
    %c0_i32_0 = arith.constant 0 : i32
    return %arg0, %c0_i32 : i32, i32
  }
}

</mosaic_0001>

<llo_original>
// kernel: tpu_custom_call.1
$region0: #{tpu_custom_call.1}
  #allocation0 [shape = 'u32[]', space=smem, size = 0x4, offset = 0x4, fixed_abs, tag = 'smem constant byte address 0x4 - core index']
  #allocation1 [shape = 'u32[144,128]{1,0:T(1,128)}', space=vmem, size = 0x12000, scoped, tag = 'internal scratch']
  %s0 = inlined_call_operand.hbm [shape: f32[16,32], index: 0, kind: input, shape index: {}]
  %s1 = inlined_call_operand.hbm [shape: f32[16,32], index: 1, kind: input, shape index: {}]
  %s2 = inlined_call_operand.hbm [shape: f32[16,128], index: 2, kind: output, shape index: {}]
  %s3 = sld [smem:[#allocation0]]
  $region49: #{tpu_custom_call.1} parent=0
    _
  %s5 = ssub.s32 1, %s3
  %s6 = scalar_select 0, %s5, %s3
  $region1: #{tpu_custom_call.1} parent=0
    #allocation2 [shape = 'u8[8192]{0}', space=vmem, size = 0x2000, scoped, tag = 'input window, operand 0']
    #allocation3 [shape = 's32[2]{0}', space=sflag, size = 0x8, scoped, tag = 'scoped memory for tpu_custom_call.1']
    #allocation4 [shape = 's32[2]{0}', space=sflag, size = 0x8, scoped, tag = 'scoped memory for tpu_custom_call.1']
    #allocation5 [shape = 'u8[8192]{0}', space=vmem, size = 0x2000, scoped, tag = 'input window, operand 1']
    #allocation6 [shape = 's32[2]{0}', space=sflag, size = 0x8, scoped, tag = 'scoped memory for tpu_custom_call.1']
    #allocation7 [shape = 'u8[8192]{0}', space=vmem, size = 0x2000, scoped, tag = 'output window, operand 0']
    %7 = vsyncpa [#allocation3], 0
    %s8 = scalar_lea.sflag [#allocation3], 1
    %9 = vsyncpa %s8, 0
    %10 = vsyncpa [#allocation6], 0
    %s11 = scalar_lea.sflag [#allocation6], 1
    %12 = vsyncpa %s11, 0
    %13 = vsyncpa [#allocation4], 0
    %s14 = scalar_lea.sflag [#allocation4], 1
    %15 = vsyncpa %s14, 0
    loop: start=0, step=1, limit=4
    $region2: #{tpu_custom_call.1} parent=1 // loop_pre_header
      _
    $region3: #{tpu_custom_call.1} parent=1 // loop_header
      %s17 = sphi 0, %s21
      %p18 = scmp.ge.s32.totalorder %s17, 4
      %s27 = sphi 0, %s29
      %s30 = sphi 0, %s27
      %s31 = sphi 0, %s30
      %s47 = sphi 0, %s31
      %s53 = sphi 0, %s55
      %s56 = sphi 0, %s53
      %s57 = sphi 0, %s56
      %s73 = sphi 0, %s57
      %s79 = sphi 0, %s81
      %s82 = sphi 0, %s79
      %s83 = sphi 0, %s82
      %s99 = sphi 0, %s83
    $region4: #{tpu_custom_call.1} parent=1 // loop_header_branch
      %20 = sbr.rel (%p18) target = $region8
    $region5: #{tpu_custom_call.1} parent=1 // loop_body
      %s22 = ssub.s32 %s17, 1
      %s23 = ssub.s32 %s17, 2
      %s24 = sadd.s32 %s17, 1
      %s25 = ssub.s32 %s17, %s24
      %p26 = scmp.eq.s32.totalorder %s25, 0
      %s28 = sadd.s32 %s27, 1
      %s29 = scalar_select %p26, %s27, %s28
      %p32 = pneg %p26
      %p33 = scmp.eq.s32.totalorder %s17, 1
      %p34 = por %p32, %p33
      %p35 = scmp.ne.s32.totalorder %s27, %s30
      %p36 = scmp.eq.s32.totalorder %s17, 0
      %p37 = por %p35, %p36
      %p38 = scmp.ne.s32.totalorder %s27, %s30
      %p39 = scmp.eq.s32.totalorder %s22, 1
      %p40 = por %p38, %p39
      %p41 = scmp.ne.s32.totalorder %s30, %s31
      %p42 = scmp.eq.s32.totalorder %s22, 0
      %p43 = por %p41, %p42
      %p44 = scmp.ne.s32.totalorder %s30, %s31
      %p45 = scmp.eq.s32.totalorder %s23, 1
      %p46 = por %p44, %p45
      %p48 = scmp.ne.s32.totalorder %s31, %s47
      %p49 = scmp.eq.s32.totalorder %s23, 0
      %p50 = por %p48, %p49
      %s51 = ssub.s32 %s17, %s24
      %p52 = scmp.eq.s32.totalorder %s51, 0
      %s54 = sadd.s32 %s53, 1
      %s55 = scalar_select %p52, %s53, %s54
      %p58 = pneg %p52
      %p59 = scmp.eq.s32.totalorder %s17, 1
      %p60 = por %p58, %p59
      %p61 = scmp.ne.s32.totalorder %s53, %s56
      %p62 = scmp.eq.s32.totalorder %s17, 0
      %p63 = por %p61, %p62
      %p64 = scmp.ne.s32.totalorder %s53, %s56
      %p65 = scmp.eq.s32.totalorder %s22, 1
      %p66 = por %p64, %p65
      %p67 = scmp.ne.s32.totalorder %s56, %s57
      %p68 = scmp.eq.s32.totalorder %s22, 0
      %p69 = por %p67, %p68
      %p70 = scmp.ne.s32.totalorder %s56, %s57
      %p71 = scmp.eq.s32.totalorder %s23, 1
      %p72 = por %p70, %p71
      %p74 = scmp.ne.s32.totalorder %s57, %s73
      %p75 = scmp.eq.s32.totalorder %s23, 0
      %p76 = por %p74, %p75
      %s77 = ssub.s32 %s17, %s24
      %p78 = scmp.eq.s32.totalorder %s77, 0
      %s80 = sadd.s32 %s79, 1
      %s81 = scalar_select %p78, %s79, %s80
      %p84 = pneg %p78
      %p85 = scmp.eq.s32.totalorder %s17, 1
      %p86 = por %p84, %p85
      %p87 = scmp.ne.s32.totalorder %s79, %s82
      %p88 = scmp.eq.s32.totalorder %s17, 0
      %p89 = por %p87, %p88
      %p90 = scmp.ne.s32.totalorder %s79, %s82
      %p91 = scmp.eq.s32.totalorder %s22, 1
      %p92 = por %p90, %p91
      %p93 = scmp.ne.s32.totalorder %s82, %s83
      %p94 = scmp.eq.s32.totalorder %s22, 0
      %p95 = por %p93, %p94
      %p96 = scmp.ne.s32.totalorder %s82, %s83
      %p97 = scmp.eq.s32.totalorder %s23, 1
      %p98 = por %p96, %p97
      %p100 = scmp.ne.s32.totalorder %s83, %s99
      %p101 = scmp.eq.s32.totalorder %s23, 0
      %p102 = por %p100, %p101
      %p103 = scmp.le.s32.totalorder 1, %s17
      %p104 = scmp.lt.s32.totalorder %s17, 3
      %p105 = pnand %p103, %p104
      %p106 = pneg %p105
      // Predicated region
      $region9: #{tpu_custom_call.1} parent=5 // pred_check
        _
      $region10: #{tpu_custom_call.1} parent=5 // pred_check_branch
        %108 = sbr.rel (%p105) target = $region12
      $region11: #{tpu_custom_call.1} parent=5 // pred_region
        %s109 = ssub.s32 %s17, 1
      $region12: #{tpu_custom_call.1} parent=5 // pred_fallthru
        _
      %p110 = scmp.lt.s32.totalorder %s17, 2
      // Predicated region
      $region13: #{tpu_custom_call.1} parent=5 // pred_check
        %p111 = pneg %p110
      $region14: #{tpu_custom_call.1} parent=5 // pred_check_branch
        %113 = sbr.rel (%p111) target = $region16
      $region15: #{tpu_custom_call.1} parent=5 // pred_region
        // Predicated region
        $region17: #{tpu_custom_call.1} parent=15 // pred_check
          %p114 = pneg %p37
        $region18: #{tpu_custom_call.1} parent=15 // pred_check_branch
          %116 = sbr.rel (%p114) target = $region20
        $region19: #{tpu_custom_call.1} parent=15 // pred_region
          %s117 = sand.u32 %s27, 1
          %s118 = scalar_lea.sflag [#allocation3], %s117
          %s119 = sand.u32 %s27, 1
          %s120 = smul.addr %s119, 8
          %s121 = scalar_lea.vmem [#allocation2], %s120
          %s123 = ssub.s32 128, 128
          %124 = vsyncadd %s118, %s123
          %s125 = smul.addr %s17, 128
          %s126 = scalar_lea.hbm %s0, %s125
          %s128 = sshll.u32 %s121, 4
          %s129 = int_to_ptr.vmem [resolvable:$true] %s128
          %131 = dma.hbm_to_vmem [thread:$0]  %s126, 128, %s129, %s118
        $region20: #{tpu_custom_call.1} parent=15 // pred_fallthru
          _
        // Predicated region
        $region21: #{tpu_custom_call.1} parent=15 // pred_check
          %p132 = pneg %p63
        $region22: #{tpu_custom_call.1} parent=15 // pred_check_branch
          %134 = sbr.rel (%p132) target = $region24
        $region23: #{tpu_custom_call.1} parent=15 // pred_region
          %s135 = sand.u32 %s53, 1
          %s136 = scalar_lea.sflag [#allocation6], %s135
          %s137 = sand.u32 %s53, 1
          %s138 = smul.addr %s137, 8
          %s139 = scalar_lea.vmem [#allocation5], %s138
          %s141 = ssub.s32 128, 128
          %142 = vsyncadd %s136, %s141
          %s143 = smul.addr %s17, 128
          %s144 = scalar_lea.hbm %s1, %s143
          %s146 = sshll.u32 %s139, 4
          %s147 = int_to_ptr.vmem [resolvable:$true] %s146
          %149 = dma.hbm_to_vmem [thread:$0]  %s144, 128, %s147, %s136
        $region24: #{tpu_custom_call.1} parent=15 // pred_fallthru
          _
      $region16: #{tpu_custom_call.1} parent=5 // pred_fallthru
        _
      %p150 = scmp.le.s32.totalorder 1, %s17
      %p151 = scmp.lt.s32.totalorder %s17, 3
      %p152 = pnand %p150, %p151
      %p153 = pneg %p152
      // Predicated region
      $region25: #{tpu_custom_call.1} parent=5 // pred_check
        _
      $region26: #{tpu_custom_call.1} parent=5 // pred_check_branch
        %155 = sbr.rel (%p152) target = $region28
      $region27: #{tpu_custom_call.1} parent=5 // pred_region
        %s156 = ssub.s32 %s17, 1
        %s157 = sand.u32 %s30, 1
        %s158 = scalar_lea.sflag [#allocation3], %s157
        %s159 = sand.u32 %s30, 1
        %s160 = smul.addr %s159, 8
        %s161 = scalar_lea.vmem [#allocation2], %s160
        // Predicated region
        $region29: #{tpu_custom_call.1} parent=27 // pred_check
          %p162 = pneg %p43
        $region30: #{tpu_custom_call.1} parent=27 // pred_check_branch
          %164 = sbr.rel (%p162) target = $region32
        $region31: #{tpu_custom_call.1} parent=27 // pred_region
          %165 = dma.done %s158, 128
        $region32: #{tpu_custom_call.1} parent=27 // pred_fallthru
          _
        %s166 = sand.u32 %s56, 1
        %s167 = scalar_lea.sflag [#allocation6], %s166
        %s168 = sand.u32 %s56, 1
        %s169 = smul.addr %s168, 8
        %s170 = scalar_lea.vmem [#allocation5], %s169
        // Predicated region
        $region33: #{tpu_custom_call.1} parent=27 // pred_check
          %p171 = pneg %p69
        $region34: #{tpu_custom_call.1} parent=27 // pred_check_branch
          %173 = sbr.rel (%p171) target = $region36
        $region35: #{tpu_custom_call.1} parent=27 // pred_region
          %174 = dma.done %s167, 128
        $region36: #{tpu_custom_call.1} parent=27 // pred_fallthru
          _
        %s175 = sand.u32 %s30, 1
        %s176 = scalar_lea.sflag [#allocation3], %s175
        %s177 = sand.u32 %s30, 1
        %s178 = smul.addr %s177, 8
        %s179 = scalar_lea.vmem [#allocation2], %s178
        %p180 = pneg %p43
        %p181 = pneg %p40
        %s182 = sand.u32 %s56, 1
        %s183 = scalar_lea.sflag [#allocation6], %s182
        %s184 = sand.u32 %s56, 1
        %s185 = smul.addr %s184, 8
        %s186 = scalar_lea.vmem [#allocation5], %s185
        %p187 = pneg %p69
        %p188 = pneg %p66
        %p189 = pneg %p95
        %p190 = pneg %p92
        %s191 = sand.u32 %s82, 1
        %s192 = scalar_lea.sflag [#allocation4], %s191
        %s193 = sand.u32 %s82, 1
        %s194 = smul.addr %s193, 8
        %s195 = scalar_lea.vmem [#allocation7], %s194
        %v196 = vld [vmem:[%s161] sm:$0xff]
        %v197 = vld [vmem:[%s170] sm:$0xff]
        %vm198 = vcmask 261120
        %v199 = vsel %vm198, %v196, -inf
        %200 = vmax.xlane.f32.xlu0 %v199
        %v201 = vpop.xlane.xlu0 %200
        %v202 = vsub.f32 %v196, %v201
        %v203 = vmul.f32 %v202, 1.442695
        %v204 = vpow.pop %v203
        %v205 = vsel %vm198, %v204, 0.0
        %206 = vadd.xlane.f32.xlu0 %v205
        %v207 = vpop.xlane.xlu0 %206
        %v208 = vlog2.pop %v207
        %v209 = vmul.f32 %v208, 0.6931472
        %v210 = vadd.f32 %v201, %v209
        %v211 = vmul.f32 %v197, %v196
        %v212 = vsel %vm198, %v211, 0.0
        %213 = vadd.xlane.f32.xlu0 %v212
        %v214 = vpop.xlane.xlu0 %213
        %v215 = vsel %vm198, %v197, 0.0
        %216 = vadd.xlane.f32.xlu0 %v215
        %v217 = vpop.xlane.xlu0 %216
        %v218 = vmul.f32 %v210, %v217
        %v219 = vsub.f32 %v218, %v214
        %s220 = smul.u32 %s22, 8
        %v221 = vlaneseq
        %v222 = vshrl.u32 %v221, 7
        %v223 = vstv %s220
        %v224 = vadd.s32 %v223, %v222
        %vm225 = vcmp.lt.s32.totalorder %v224, 16
        %v226 = vsel %vm225, %v219, 0.0
        %vm227 = vcmask 7168
        %v228 = vsel %vm227, %v226, 0.0
        %229 = vadd.xlane.f32.xlu0 %v228
        %v230 = vpop.xlane.xlu0 %229
        %v231 = vrot.slane %v230, 4
        %v232 = vadd.f32 %v230, %v231
        %v233 = vrot.slane %v232, 2
        %v234 = vadd.f32 %v232, %v233
        %v235 = vrot.slane %v234, 1
        %v236 = vadd.f32 %v234, %v235
        %s237 = vtos %v236
        %v238 = vstv %s237
        %239 = vst [vmem:[%s195] sm:$0xff] %v238
        %s240 = sand.u32 %s82, 1
        %s241 = scalar_lea.sflag [#allocation4], %s240
        %s242 = sand.u32 %s82, 1
        %s243 = smul.addr %s242, 8
        %s244 = scalar_lea.vmem [#allocation7], %s243
        // Predicated region
        $region37: #{tpu_custom_call.1} parent=27 // pred_check
          %p245 = pneg %p92
        $region38: #{tpu_custom_call.1} parent=27 // pred_check_branch
          %247 = sbr.rel (%p245) target = $region40
        $region39: #{tpu_custom_call.1} parent=27 // pred_region
          %s249 = ssub.s32 128, 128
          %250 = vsyncadd %s241, %s249
          %s251 = smul.addr %s22, 128
          %s252 = scalar_lea.hbm %s2, %s251
          %s254 = sshll.u32 %s244, 4
          %s255 = int_to_ptr.vmem [resolvable:$true] %s254
          %257 = dma.vmem_to_hbm [thread:$0]  %s255, 128, %s252, %s241
        $region40: #{tpu_custom_call.1} parent=27 // pred_fallthru
          _
      $region28: #{tpu_custom_call.1} parent=5 // pred_fallthru
        _
      %p258 = scmp.le.s32.totalorder 2, %s17
      // Predicated region
      $region41: #{tpu_custom_call.1} parent=5 // pred_check
        %p259 = pneg %p258
      $region42: #{tpu_custom_call.1} parent=5 // pred_check_branch
        %261 = sbr.rel (%p259) target = $region44
      $region43: #{tpu_custom_call.1} parent=5 // pred_region
        %s262 = ssub.s32 %s17, 2
        // Predicated region
        $region45: #{tpu_custom_call.1} parent=43 // pred_check
          %p263 = pneg %p98
        $region46: #{tpu_custom_call.1} parent=43 // pred_check_branch
          %265 = sbr.rel (%p263) target = $region48
        $region47: #{tpu_custom_call.1} parent=43 // pred_region
          %s266 = sand.u32 %s83, 1
          %s267 = scalar_lea.sflag [#allocation4], %s266
          %s268 = sand.u32 %s83, 1
          %s269 = smul.addr %s268, 8
          %s270 = scalar_lea.vmem [#allocation7], %s269
          %271 = dma.done %s267, 128
        $region48: #{tpu_custom_call.1} parent=43 // pred_fallthru
          _
      $region44: #{tpu_custom_call.1} parent=5 // pred_fallthru
        _
    $region6: #{tpu_custom_call.1} parent=1 // loop_footer
      %s21 = sadd.s32 1, %s17
    $region7: #{tpu_custom_call.1} parent=1 // loop_footer_branch
      %16 = sbr.rel target = $region3
    $region8: #{tpu_custom_call.1} parent=1 // loop_exit
      _
    %272 = vsyncpa [#allocation3], 1
    %s273 = scalar_lea.sflag [#allocation3], 1
    %274 = vsyncpa %s273, 1
    %275 = vsyncpa [#allocation6], 1
    %s276 = scalar_lea.sflag [#allocation6], 1
    %277 = vsyncpa %s276, 1
    %278 = vsyncpa [#allocation4], 1
    %s279 = scalar_lea.sflag [#allocation4], 1
    %280 = vsyncpa %s279, 1

</llo_original>
